<compile_context>
chip_gen: v5e
topology: v5e:2x2
jax: 0.10.0
libtpu: 0.0.40
codegen_flags: <defaults>
</compile_context>

<pallas_src>
import functools

import jax
import jax.numpy as jnp
from jax.experimental import pallas as pl
from jax.experimental.pallas import tpu as pltpu

_LANE = 128                     # lane width (last-dim tiling unit)
_DEFAULT_TILE_N = 4096          # batch (lane-axis) tile; 2048-4096 tracks HBM roofline
_DEFAULT_MIN_PALLAS_ROWS = 1024 # below this, plain XLA beats kernel launch overhead


def _round_up(x: int, m: int) -> int:
    return (x + m - 1) // m * m


def _pick_batch_tile(n: int, tile_n: int):
    """Pick the lane-axis (batch) tile and grid.

    * n <= 128: single full-extent block (no OOB lanes at all).
    * n  > 128: tn is a multiple of 128 and <= n, chosen so the grid has >= 2
      steps when possible (v7x megacore); the non-divisible tail is handled by
      Pallas boundary-block clamping -- no jnp.pad pass over the activations.
    """
    if n <= _LANE:
        return n, (1,)
    tn = min(tile_n, _round_up((n + 1) // 2, _LANE))
    return tn, (pl.cdiv(n, tn),)


# ----------------------------------------------------------------------------
# Linear kernel (batch-on-lanes): yT[o, n] = b[o] + sum_i W[o, i] * xT[i, n]
#   xT_ref : (IN, TN)   f32 activations, batch on lanes
#   w_ref  : (OUT, IN)  f32 (PyTorch layout, VMEM-resident across the grid)
#   b_ref  : (OUT, 1)   f32
#   oT_ref : (OUT, TN)  f32, lane-dense store, no output padding
# Pure VPU broadcast-FMAs (K=IN=4): exact f32, kernel stays HBM-bound.
# ----------------------------------------------------------------------------
def _linear_kernel_T(xT_ref, w_ref, b_ref, oT_ref):
    in_f = w_ref.shape[1]
    acc = b_ref[...] + w_ref[:, 0:1] * xT_ref[0:1, :]          # (OUT, TN)
    for i in range(1, in_f):                                   # static unroll
        acc = acc + w_ref[:, i:i + 1] * xT_ref[i:i + 1, :]
    oT_ref[...] = acc.astype(oT_ref.dtype)


def make_linear(weight, bias, *, tile_n=_DEFAULT_TILE_N,
                min_pallas_rows=_DEFAULT_MIN_PALLAS_ROWS):
    """weight: (OUT, IN) PyTorch layout; bias: (OUT,).  Returns x -> y callable."""
    out_f, in_f = weight.shape

    # One-time parameter prep (hoisted out of the per-call path).
    w_prep = jnp.asarray(weight, jnp.float32)                  # (OUT, IN)
    b_col = jnp.asarray(bias, jnp.float32).reshape(out_f, 1)   # (OUT, 1)
    b_row = jnp.asarray(bias, jnp.float32)                     # for the fallback

    def fwd(x):
        n = x.shape[0]
        if n < min_pallas_rows:
            # Tiny-batch fallback: fused XLA op, f32-exact (HIGHEST precision).
            return jnp.dot(x.astype(jnp.float32), w_prep.T,
                           precision=jax.lax.Precision.HIGHEST) + b_row
        tn, grid = _pick_batch_tile(n, tile_n)
        xT = x.T                                               # (IN, N): batch on lanes
        yT = pl.pallas_call(
            _linear_kernel_T,
            out_shape=jax.ShapeDtypeStruct((out_f, n), jnp.float32),
            grid=grid,
            in_specs=[
                pl.BlockSpec((in_f, tn), lambda i: (0, i)),     # batch-tiled
                pl.BlockSpec((out_f, in_f), lambda i: (0, 0)),  # VMEM-resident
                pl.BlockSpec((out_f, 1), lambda i: (0, 0)),     # VMEM-resident
            ],
            out_specs=pl.BlockSpec((out_f, tn), lambda i: (0, i)),
            compiler_params=pltpu.CompilerParams(
                dimension_semantics=("parallel",)),
        )(xT, w_prep, b_col)
        return yT.T                                            # (N, OUT), no slicing

    return jax.jit(fwd)


# ----------------------------------------------------------------------------
# Bilinear kernel (batch-on-lanes):
#   yT[o, n] = b[o] + sum_{i,j} Wf[o, i*I2+j] * x1T[i, n] * x2T[j, n]
#   x1T_ref : (I1, TN)        f32
#   x2T_ref : (I2, TN)        f32
#   w_ref   : (OUT, I1*I2)    f32, Wf[o, i*I2+j] = W[o, i, j] (packed at init)
#   b_ref   : (OUT, 1)        f32
#   oT_ref  : (OUT, TN)       f32, lane-dense store, no output padding
# Outer-product features consumed on the fly by VPU broadcast-FMAs: no
# (TN, I2*OUT_PAD) intermediate, no spill-heavy epilogue, exact f32.
# ----------------------------------------------------------------------------
def _bilinear_kernel_T(x1T_ref, x2T_ref, w_ref, b_ref, oT_ref, *, i1, i2):
    x2_rows = [x2T_ref[j:j + 1, :] for j in range(i2)]         # hoist loads
    acc = None
    for i in range(i1):                                        # static unroll (20 FMAs)
        x1_row = x1T_ref[i:i + 1, :]                           # (1, TN)
        for j in range(i2):
            k = i * i2 + j
            term = w_ref[:, k:k + 1] * (x1_row * x2_rows[j])   # (OUT, TN)
            acc = term if acc is None else acc + term
    oT_ref[...] = (acc + b_ref[...]).astype(oT_ref.dtype)


def make_bilinear(weight, bias, *, tile_n=_DEFAULT_TILE_N,
                  min_pallas_rows=_DEFAULT_MIN_PALLAS_ROWS):
    """weight: (OUT, I1, I2) PyTorch layout; bias: (OUT,).  Returns (x1, x2) -> y."""
    out_f, i1, i2 = weight.shape

    # One-time packing: (OUT, I1, I2) -> (OUT, I1*I2); bias as a column.
    w3 = jnp.asarray(weight, jnp.float32)
    w_flat = w3.reshape(out_f, i1 * i2)
    b_col = jnp.asarray(bias, jnp.float32).reshape(out_f, 1)
    b_row = jnp.asarray(bias, jnp.float32)

    kernel = functools.partial(_bilinear_kernel_T, i1=i1, i2=i2)

    def fwd(x1, x2):
        n = x1.shape[0]
        if n < min_pallas_rows:
            # Tiny-batch fallback: fused XLA op, f32-exact (HIGHEST precision).
            return jnp.einsum("ni,oij,nj->no",
                              x1.astype(jnp.float32), w3, x2.astype(jnp.float32),
                              precision=jax.lax.Precision.HIGHEST) + b_row
        tn, grid = _pick_batch_tile(n, tile_n)
        x1T = x1.T                                             # (I1, N)
        x2T = x2.T                                             # (I2, N)
        yT = pl.pallas_call(
            kernel,
            out_shape=jax.ShapeDtypeStruct((out_f, n), jnp.float32),
            grid=grid,
            in_specs=[
                pl.BlockSpec((i1, tn), lambda i: (0, i)),            # batch-tiled
                pl.BlockSpec((i2, tn), lambda i: (0, i)),            # batch-tiled
                pl.BlockSpec((out_f, i1 * i2), lambda i: (0, 0)),    # VMEM-resident
                pl.BlockSpec((out_f, 1), lambda i: (0, 0)),          # VMEM-resident
            ],
            out_specs=pl.BlockSpec((out_f, tn), lambda i: (0, i)),
            compiler_params=pltpu.CompilerParams(
                dimension_semantics=("parallel",)),
        )(x1T, x2T, w_flat, b_col)
        return yT.T                                            # (N, OUT), no slicing

    return jax.jit(fwd)


# ----------------------------------------------------------------------------
# Network: dict-adapter, exactly mirrors the PyTorch module's forward semantics.
# (Pure glue -- no tensor compute here.)
# TODO(synk): `setup_module(dict)` config-to-module instantiation is framework
# glue with no tensor compute; we accept an already-built callable instead.
# ----------------------------------------------------------------------------
class Network:
    def __init__(self, module_fn, input_keys, output_keys):
        self.module_fn = module_fn
        self.input_keys = tuple(input_keys)
        self.output_keys = tuple(output_keys)

    def __call__(self, batch: dict) -> dict:
        out = self.module_fn(*tuple(batch[key] for key in self.input_keys))
        if not isinstance(out, (tuple, list)):
            out = (out,)
        return {key: out[i] for i, key in enumerate(self.output_keys)}


if __name__ == "__main__":
    key = jax.random.PRNGKey(0)
    k1, k2, k3, k4, k5, k6, k7, k8, k9, k10 = jax.random.split(key, 10)

    N, IN, OUT = 2, 4, 6
    I1, I2 = 4, 5

    lin_w = jax.random.normal(k1, (OUT, IN), jnp.float32) * 0.1    # PyTorch (out, in)
    lin_b = jax.random.normal(k2, (OUT,), jnp.float32) * 0.1
    bil_w = jax.random.normal(k3, (OUT, I1, I2), jnp.float32) * 0.1  # (out, in1, in2)
    bil_b = jax.random.normal(k4, (OUT,), jnp.float32) * 0.1

    # min_pallas_rows=0 forces the Pallas path even at the docstring's N=2 so the
    # kernels are actually exercised here; in production the default (1024) routes
    # tiny batches to the cheaper fused-XLA fallback.
    net_linear = Network(make_linear(lin_w, lin_b, min_pallas_rows=0),
                         input_keys=["input"], output_keys=["output"])
    net_bilinear = Network(make_bilinear(bil_w, bil_b, min_pallas_rows=0),
                           input_keys=["input1", "input2"], output_keys=["output"])

    # Pure-VPU f32 references (exact, no MXU precision ambiguity).
    def ref_linear(x):
        return (x[:, None, :] * lin_w[None, :, :]).sum(-1) + lin_b

    def ref_bilinear(x1, x2):
        prod = x1[:, None, :, None] * x2[:, None, None, :] * bil_w[None, :, :, :]
        return prod.sum((2, 3)) + bil_b

    # --- Example 1: Network(Linear(4, 6), ["input"], ["output"]) at (2, 4) ---
    x = jax.random.normal(k5, (N, IN), jnp.float32)
    out1 = net_linear({"input": x})
    jax.block_until_ready(out1["output"])
    assert out1["output"].shape == (N, OUT)
    assert jnp.allclose(out1["output"], ref_linear(x), atol=1e-5, rtol=1e-5)

    # --- Example 2: Network(Bilinear(4, 5, 6), ["input1","input2"], ["output"]) ---
    x1 = jax.random.normal(k6, (N, I1), jnp.float32)
    x2 = jax.random.normal(k7, (N, I2), jnp.float32)
    out2 = net_bilinear({"input1": x1, "input2": x2})
    jax.block_until_ready(out2["output"])
    assert out2["output"].shape == (N, OUT)
    assert jnp.allclose(out2["output"], ref_bilinear(x1, x2), atol=1e-5, rtol=1e-5)

    # --- Non-tile-aligned batch: exercises multi-step grid + boundary tile ---
    NB = 300
    xb = jax.random.normal(k8, (NB, IN), jnp.float32)
    x1b = jax.random.normal(k9, (NB, I1), jnp.float32)
    x2b = jax.random.normal(k10, (NB, I2), jnp.float32)
    ob1 = net_linear({"input": xb})["output"]
    ob2 = net_bilinear({"input1": x1b, "input2": x2b})["output"]
    jax.block_until_ready((ob1, ob2))
    assert ob1.shape == (NB, OUT) and ob2.shape == (NB, OUT)
    assert jnp.allclose(ob1, ref_linear(xb), atol=1e-5, rtol=1e-5)
    assert jnp.allclose(ob2, ref_bilinear(x1b, x2b), atol=1e-5, rtol=1e-5)

    # --- Default small-N fallback path (pure fused XLA) also matches ---
    net_linear_default = Network(make_linear(lin_w, lin_b),
                                 input_keys=["input"], output_keys=["output"])
    of = net_linear_default({"input": x})["output"]
    jax.block_until_ready(of)
    assert jnp.allclose(of, ref_linear(x), atol=1e-5, rtol=1e-5)

    print("KERNEL_OK")
</pallas_src>

<mosaic_0001>
module attributes {stable_mosaic.version = 11 : i64} {
  func.func @_linear_kernel_T(%arg0: i32, %arg1: memref<4x2xf32, #tpu.memory_space<vmem>>, %arg2: memref<6x4xf32, #tpu.memory_space<vmem>>, %arg3: memref<6x1xf32, #tpu.memory_space<vmem>>, %arg4: memref<6x2xf32, #tpu.memory_space<vmem>>) attributes {dimension_semantics = [#tpu.dimension_semantics<parallel>], iteration_bounds = array<i64: 1>, scalar_prefetch = 0 : i64, scratch_operands = 0 : i64, tpu.core_type = #tpu.core_type<tc>, window_params = [{transform_indices = @transform_0, window_bounds = array<i64: 4, 2>}, {pipeline_mode = #tpu.pipeline_mode<synchronous>, transform_indices = @transform_1, window_bounds = array<i64: 6, 4>}, {pipeline_mode = #tpu.pipeline_mode<synchronous>, transform_indices = @transform_2, window_bounds = array<i64: 6, 1>}, {transform_indices = @transform_3, window_bounds = array<i64: 6, 2>}]} {
    %c0 = arith.constant 0 : index
    %c0_0 = arith.constant 0 : index
    %0 = vector.load %arg3[%c0, %c0_0] : memref<6x1xf32, #tpu.memory_space<vmem>>, vector<6x1xf32>
    %c0_1 = arith.constant 0 : index
    %c0_2 = arith.constant 0 : index
    %1 = vector.load %arg2[%c0_1, %c0_2] : memref<6x4xf32, #tpu.memory_space<vmem>>, vector<6x1xf32>
    %c0_3 = arith.constant 0 : index
    %c0_4 = arith.constant 0 : index
    %2 = vector.load %arg1[%c0_3, %c0_4] : memref<4x2xf32, #tpu.memory_space<vmem>>, vector<1x2xf32>
    %3 = vector.broadcast %1 : vector<6x1xf32> to vector<6x2xf32>
    %4 = vector.broadcast %2 : vector<1x2xf32> to vector<6x2xf32>
    %5 = arith.mulf %3, %4 : vector<6x2xf32>
    %6 = vector.broadcast %0 : vector<6x1xf32> to vector<6x2xf32>
    %7 = arith.addf %6, %5 : vector<6x2xf32>
    %c0_5 = arith.constant 0 : index
    %c1 = arith.constant 1 : index
    %8 = vector.load %arg2[%c0_5, %c1] : memref<6x4xf32, #tpu.memory_space<vmem>>, vector<6x1xf32>
    %c1_6 = arith.constant 1 : index
    %c0_7 = arith.constant 0 : index
    %9 = vector.load %arg1[%c1_6, %c0_7] : memref<4x2xf32, #tpu.memory_space<vmem>>, vector<1x2xf32>
    %10 = vector.broadcast %8 : vector<6x1xf32> to vector<6x2xf32>
    %11 = vector.broadcast %9 : vector<1x2xf32> to vector<6x2xf32>
    %12 = arith.mulf %10, %11 : vector<6x2xf32>
    %13 = arith.addf %7, %12 : vector<6x2xf32>
    %c0_8 = arith.constant 0 : index
    %c2 = arith.constant 2 : index
    %14 = vector.load %arg2[%c0_8, %c2] : memref<6x4xf32, #tpu.memory_space<vmem>>, vector<6x1xf32>
    %c2_9 = arith.constant 2 : index
    %c0_10 = arith.constant 0 : index
    %15 = vector.load %arg1[%c2_9, %c0_10] : memref<4x2xf32, #tpu.memory_space<vmem>>, vector<1x2xf32>
    %16 = vector.broadcast %14 : vector<6x1xf32> to vector<6x2xf32>
    %17 = vector.broadcast %15 : vector<1x2xf32> to vector<6x2xf32>
    %18 = arith.mulf %16, %17 : vector<6x2xf32>
    %19 = arith.addf %13, %18 : vector<6x2xf32>
    %c0_11 = arith.constant 0 : index
    %c3 = arith.constant 3 : index
    %20 = vector.load %arg2[%c0_11, %c3] : memref<6x4xf32, #tpu.memory_space<vmem>>, vector<6x1xf32>
    %c3_12 = arith.constant 3 : index
    %c0_13 = arith.constant 0 : index
    %21 = vector.load %arg1[%c3_12, %c0_13] : memref<4x2xf32, #tpu.memory_space<vmem>>, vector<1x2xf32>
    %22 = vector.broadcast %20 : vector<6x1xf32> to vector<6x2xf32>
    %23 = vector.broadcast %21 : vector<1x2xf32> to vector<6x2xf32>
    %24 = arith.mulf %22, %23 : vector<6x2xf32>
    %25 = arith.addf %19, %24 : vector<6x2xf32>
    %c0_14 = arith.constant 0 : index
    %c0_15 = arith.constant 0 : index
    %26 = vector.load %arg4[%c0_14, %c0_15] : memref<6x2xf32, #tpu.memory_space<vmem>>, vector<6x2xf32>
    tpu.vector_store %arg4[%c0_14, %c0_15], %25 {strides = array<i32>} : memref<6x2xf32, #tpu.memory_space<vmem>>, vector<6x2xf32>,
    return
  }
  func.func @transform_0(%arg0: i32) -> (i32, i32) {
    %c0_i32 = arith.constant 0 : i32
    %c0_i32_0 = arith.constant 0 : i32
    return %c0_i32, %arg0 : i32, i32
  }
  func.func @transform_1(%arg0: i32) -> (i32, i32) {
    %c0_i32 = arith.constant 0 : i32
    %c0_i32_0 = arith.constant 0 : i32
    %c0_i32_1 = arith.constant 0 : i32
    return %c0_i32, %c0_i32_0 : i32, i32
  }
  func.func @transform_2(%arg0: i32) -> (i32, i32) {
    %c0_i32 = arith.constant 0 : i32
    %c0_i32_0 = arith.constant 0 : i32
    %c0_i32_1 = arith.constant 0 : i32
    return %c0_i32, %c0_i32_0 : i32, i32
  }
  func.func @transform_3(%arg0: i32) -> (i32, i32) {
    %c0_i32 = arith.constant 0 : i32
    %c0_i32_0 = arith.constant 0 : i32
    return %c0_i32, %arg0 : i32, i32
  }
}

</mosaic_0001>

<llo_original>
// kernel: fwd.1
$region0: #{fwd.1}
  #allocation0 [shape = 'u32[]', space=smem, size = 0x4, offset = 0x4, fixed_abs, tag = 'smem constant byte address 0x4 - core index']
  #allocation1 [shape = 'u32[72,128]{1,0:T(1,128)}', space=vmem, size = 0x9000, scoped, tag = 'internal scratch']
  %s0 = inlined_call_operand.vmem [shape: f32[4,2], index: 0, kind: input, shape index: {}]
  %s1 = inlined_call_operand.hbm [shape: f32[6,4], index: 1, kind: input, shape index: {}]
  %s2 = inlined_call_operand.vmem [shape: f32[6,1], index: 2, kind: input, shape index: {}]
  %s3 = inlined_call_operand.vmem [shape: f32[6,2], index: 3, kind: output, shape index: {}]
  %s4 = sld [smem:[#allocation0]]
  $region26: #{fwd.1} parent=0
    _
  %s6 = ssub.s32 1, %s4
  %s7 = scalar_select 0, %s6, %s4
  $region1: #{fwd.1} parent=0
    #allocation2 [shape = 'u8[4096]{0}', space=vmem, size = 0x1000, scoped, tag = 'input window, operand 1, single buffered']
    #allocation3 [shape = 's32[1]{0}', space=sflag, size = 0x4, scoped, tag = 'scoped memory for fwd.1']
    %8 = vsyncpa [#allocation3], 0
    // Predicated region
    $region2: #{fwd.1} parent=1 // pred_check
      _
    $region3: #{fwd.1} parent=1 // pred_check_branch
      %10 = sbr.rel (0) target = $region5
    $region4: #{fwd.1} parent=1 // pred_region
      _
    $region5: #{fwd.1} parent=1 // pred_fallthru
      _
    // Predicated region
    $region6: #{fwd.1} parent=1 // pred_check
      _
    $region7: #{fwd.1} parent=1 // pred_check_branch
      %12 = sbr.rel (0) target = $region9
    $region8: #{fwd.1} parent=1 // pred_region
      %14 = vsyncadd [#allocation3], 0
      %s16 = sshll.u32 %s1, 4
      %s17 = int_to_ptr.hbm [resolvable:$true] %s16
      %s18 = sshll.u32 [#allocation2], 4
      %s19 = int_to_ptr.vmem [resolvable:$true] %s18
      %21 = dma.hbm_to_vmem [thread:$0]  %s17, 128, %s19, [#allocation3]
    $region9: #{fwd.1} parent=1 // pred_fallthru
      _
    // Predicated region
    $region10: #{fwd.1} parent=1 // pred_check
      _
    $region11: #{fwd.1} parent=1 // pred_check_branch
      %23 = sbr.rel (0) target = $region13
    $region12: #{fwd.1} parent=1 // pred_region
      _
    $region13: #{fwd.1} parent=1 // pred_fallthru
      _
    // Predicated region
    $region14: #{fwd.1} parent=1 // pred_check
      _
    $region15: #{fwd.1} parent=1 // pred_check_branch
      %25 = sbr.rel (0) target = $region17
    $region16: #{fwd.1} parent=1 // pred_region
      %27 = dma.done [#allocation3], 128
    $region17: #{fwd.1} parent=1 // pred_fallthru
      _
    %v28 = vld [vmem:[%s2] sm:$0x3f]
    %v29 = vld [vmem:[#allocation2] sm:$0x3f]
    %v30 = vld [vmem:[%s0] sm:$0x1]
    %32 = vset.pattern.permute.xlu0 0
    %33 = vperm.xlu0 %32, %v29
    %v34 = vpop.permute.xlu0 %33
    %v36 = vperm.slane %v30, 0
    %v37 = vmul.f32 %v34, %v36
    %39 = vset.pattern.permute.xlu0 0
    %40 = vperm.xlu0 %39, %v28
    %v41 = vpop.permute.xlu0 %40
    %v43 = vadd.f32 %v41, %v37
    %v44 = vld [vmem:[%s0 + $0x1] sm:$0x1]
    %45 = vset.pattern.permute.xlu0 1
    %46 = vperm.xlu0 %45, %v29
    %v47 = vpop.permute.xlu0 %46
    %v49 = vperm.slane %v44, 0
    %v50 = vmul.f32 %v47, %v49
    %v51 = vadd.f32 %v43, %v50
    %v52 = vld [vmem:[%s0 + $0x2] sm:$0x1]
    %53 = vset.pattern.permute.xlu0 2
    %54 = vperm.xlu0 %53, %v29
    %v55 = vpop.permute.xlu0 %54
    %v57 = vperm.slane %v52, 0
    %v58 = vmul.f32 %v55, %v57
    %v59 = vadd.f32 %v51, %v58
    %v60 = vld [vmem:[%s0 + $0x3] sm:$0x1]
    %61 = vset.pattern.permute.xlu0 3
    %62 = vperm.xlu0 %61, %v29
    %v63 = vpop.permute.xlu0 %62
    %v65 = vperm.slane %v60, 0
    %v66 = vmul.f32 %v63, %v65
    %v67 = vadd.f32 %v59, %v66
    %vm68 = vcmask 13312
    %69 = vst.msk [vmem:[%s3] sm:$0x3f] %vm68, %v67
    // Predicated region
    $region18: #{fwd.1} parent=1 // pred_check
      _
    $region19: #{fwd.1} parent=1 // pred_check_branch
      %71 = sbr.rel (0) target = $region21
    $region20: #{fwd.1} parent=1 // pred_region
      _
    $region21: #{fwd.1} parent=1 // pred_fallthru
      _
    // Predicated region
    $region22: #{fwd.1} parent=1 // pred_check
      _
    $region23: #{fwd.1} parent=1 // pred_check_branch
      %73 = sbr.rel (0) target = $region25
    $region24: #{fwd.1} parent=1 // pred_region
      _
    $region25: #{fwd.1} parent=1 // pred_fallthru
      _
    %74 = vsyncpa [#allocation3], 1

</llo_original>
